<compile_context>
chip_gen: v7x
topology: tpu7x:2x2x1
jax: 0.10.0
libtpu: 0.0.40
codegen_flags: <defaults>
</compile_context>

<pallas_src>
import functools

import jax
import jax.numpy as jnp
from jax import lax
from jax.experimental import pallas as pl
from jax.experimental.pallas import tpu as pltpu


def _round_up(x, m):
    return ((x + m - 1) // m) * m


def _fc_kernel(x_ref, w_ref, b_ref, o_ref, acc_ref):
    """One K-tile of out[c] = x @ w.T (+ b on split 0), accumulated over axis 1."""
    c = pl.program_id(0)   # K-split axis ("parallel" -> one TC per split on v7x)
    k = pl.program_id(1)   # reduction over K tiles inside this split

    @pl.when(k == 0)
    def _():
        acc_ref[...] = jnp.zeros_like(acc_ref)

    # x_ref: (B, tk) bf16, w_ref: (E, tk) bf16 -> contract the lane-dense K axis.
    acc_ref[...] += lax.dot_general(
        x_ref[...],
        w_ref[...],
        dimension_numbers=(((1,), (1,)), ((), ())),
        preferred_element_type=jnp.float32,
    )

    @pl.when(k == pl.num_programs(1) - 1)
    def _():
        # Add the bias exactly once (on split 0); other splits emit raw partials.
        bias = jnp.where(c == 0, b_ref[...], jnp.zeros_like(b_ref[...]))
        o_ref[0] = (acc_ref[...] + bias).astype(o_ref.dtype)


@functools.partial(jax.jit, static_argnames=("tk_max", "num_k_splits"))
def encode_fc_pallas(x_flat, w_ek, b, *, tk_max=32768, num_k_splits=2):
    """out[B, E] = x_flat[B, K] @ w_ek[E, K].T + b[E]  (bf16 stream, f32 accumulate)."""
    B, K = x_flat.shape
    E, Kw = w_ek.shape
    assert Kw == K, "weight K dim must match flattened feature dim"

    # --- choose a lane-dense K tiling (tk multiple of 128, large to amortize
    # --- per-grid-step overhead, small enough for v7x VMEM with double-buffering).
    ns = num_k_splits
    k128 = _round_up(K, 128)
    nk = max(-(-k128 // tk_max), ns)      # total number of K tiles
    nk = _round_up(nk, ns)                # evenly divisible across the splits
    tk = _round_up(-(-k128 // nk), 128)   # tile size, multiple of 128
    k_pad = nk * tk                       # padded K (>= K)
    ktpc = nk // ns                       # K tiles per split

    # Zero-pad K if needed; zeros contribute nothing to the reduction.
    if k_pad != K:
        x_flat = jnp.pad(x_flat, ((0, 0), (0, k_pad - K)))
        w_ek = jnp.pad(w_ek, ((0, 0), (0, k_pad - K)))

    x_bf = x_flat.astype(jnp.bfloat16)
    w_bf = w_ek.astype(jnp.bfloat16)      # no-op if already bf16 (cast at init)
    b2d = b.reshape(1, E).astype(jnp.float32)

    partials = pl.pallas_call(
        _fc_kernel,
        out_shape=jax.ShapeDtypeStruct((ns, B, E), jnp.float32),
        grid_spec=pltpu.PrefetchScalarGridSpec(
            num_scalar_prefetch=0,
            grid=(ns, ktpc),
            in_specs=[
                # activations tile: (B, tk), K on the lane axis
                pl.BlockSpec((B, tk), lambda c, k: (0, c * ktpc + k)),
                # weight tile: (E, tk), lane-dense along K (PyTorch [out, in] layout)
                pl.BlockSpec((E, tk), lambda c, k: (0, c * ktpc + k)),
                # bias: resident
                pl.BlockSpec((1, E), lambda c, k: (0, 0)),
            ],
            # one partial result per K-split; constant across the reduction axis
            out_specs=pl.BlockSpec((1, B, E), lambda c, k: (c, 0, 0)),
            scratch_shapes=[pltpu.VMEM((B, E), jnp.float32)],
        ),
        compiler_params=pltpu.CompilerParams(
            dimension_semantics=("parallel", "arbitrary"),
            # explicit VMEM budget: above the 32 MiB default scoped limit,
            # below v7x's 64 MiB physical VMEM (double-buffered tiles ~10 MiB).
            vmem_limit_bytes=48 * 1024 * 1024,
        ),
    )(x_bf, w_bf, b2d)

    # Combine the per-split partial sums (tiny [ns, B, E] reduction).
    return partials.sum(axis=0)


class EncoderPallas:
    """JAX/Pallas equivalent of Encoder(deconv=1): flatten + Linear(256*region_height, encode_dim)."""

    def __init__(self, region_height=8, encode_dim=32, key=jax.random.PRNGKey(0)):
        self.region_height = region_height
        self.encode_dim = encode_dim
        self.in_channels = 256  # fixed by nn.Linear(256 * region_height, encode_dim)
        fan_in = self.in_channels * region_height
        k_w, k_b = jax.random.split(key)
        bound = 1.0 / jnp.sqrt(fan_in)
        # PyTorch nn.Linear weight layout [out, in]; kept as-is (lane-dense K axis).
        self.w = jax.random.uniform(
            k_w, (encode_dim, fan_in), jnp.float32, minval=-bound, maxval=bound
        )
        # Cast the streamed copy to bf16 once at init (f32 master kept for reference).
        self.w_bf16 = self.w.astype(jnp.bfloat16)
        self.b = jax.random.uniform(
            k_b, (encode_dim,), jnp.float32, minval=-bound, maxval=bound
        )

    def __call__(self, feats):
        # feats: [B, 256, region_height] (output of resnet18_1d), NCL layout.
        B, C, L = feats.shape
        assert C == self.in_channels and L == self.region_height
        x_flat = feats.reshape(B, C * L)  # same flatten order as x.view(B, -1)
        return encode_fc_pallas(x_flat, self.w_bf16, self.b)


if __name__ == "__main__":
    key = jax.random.PRNGKey(0)
    k_feat, k_params = jax.random.split(key)

    batch = 2
    region_height = 8     # small stand-in for the default 1000
    encode_dim = 32       # small stand-in for the default 50

    # Deterministic stand-in for the resnet18_1d feature map: [B, 256, region_height].
    feats = jax.random.normal(k_feat, (batch, 256, region_height), jnp.float32)

    enc = EncoderPallas(region_height=region_height, encode_dim=encode_dim, key=k_params)
    code = enc(feats)
    jax.block_until_ready(code)

    # Reference check in plain JAX (same bf16-rounded operands, f32 accumulation).
    x_flat = feats.reshape(batch, -1)
    xb = x_flat.astype(jnp.bfloat16).astype(jnp.float32)
    wb = enc.w_bf16.astype(jnp.float32)
    ref = xb @ wb.T + enc.b

    assert code.shape == (batch, encode_dim)
    assert jnp.allclose(code, ref, atol=1e-3, rtol=1e-3)

    print("KERNEL_OK")
</pallas_src>

<mosaic_0001>
module attributes {stable_mosaic.version = 11 : i64} {
  func.func @_fc_kernel(%arg0: i32, %arg1: i32, %arg2: memref<2x1024xbf16, #tpu.memory_space<vmem>>, %arg3: memref<32x1024xbf16, #tpu.memory_space<vmem>>, %arg4: memref<1x32xf32, #tpu.memory_space<vmem>>, %arg5: memref<1x2x32xf32, #tpu.memory_space<vmem>>, %arg6: memref<2x32xf32, #tpu.memory_space<vmem>>) attributes {dimension_semantics = [#tpu.dimension_semantics<parallel>, #tpu.dimension_semantics<arbitrary>], iteration_bounds = array<i64: 2, 1>, scalar_prefetch = 0 : i64, scratch_operands = 1 : i64, tpu.core_type = #tpu.core_type<tc>, window_params = [{transform_indices = @transform_0, window_bounds = array<i64: 2, 1024>}, {transform_indices = @transform_1, window_bounds = array<i64: 32, 1024>}, {pipeline_mode = #tpu.pipeline_mode<synchronous>, transform_indices = @transform_2, window_bounds = array<i64: 1, 32>}, {transform_indices = @transform_3, window_bounds = array<i64: 1, 2, 32>}]} {
    %c0_i32 = arith.constant 0 : i32
    %0 = arith.cmpi eq, %arg1, %c0_i32 : i32
    %1 = arith.extui %0 : i1 to i32
    %c0_i32_0 = arith.constant 0 : i32
    %2 = arith.cmpi ne, %1, %c0_i32_0 : i32
    scf.if %2 {
      %cst_10 = arith.constant 0.000000e+00 : f32
      %12 = vector.broadcast %cst_10 : f32 to vector<2x32xf32>
      %c0_11 = arith.constant 0 : index
      %c0_12 = arith.constant 0 : index
      %13 = vector.load %arg6[%c0_11, %c0_12] : memref<2x32xf32, #tpu.memory_space<vmem>>, vector<2x32xf32>
      tpu.vector_store %arg6[%c0_11, %c0_12], %12 {strides = array<i32>} : memref<2x32xf32, #tpu.memory_space<vmem>>, vector<2x32xf32>,
    } else {
    }
    %c0 = arith.constant 0 : index
    %c0_1 = arith.constant 0 : index
    %3 = vector.load %arg6[%c0, %c0_1] : memref<2x32xf32, #tpu.memory_space<vmem>>, vector<2x32xf32>
    %c0_2 = arith.constant 0 : index
    %c0_3 = arith.constant 0 : index
    %4 = vector.load %arg2[%c0_2, %c0_3] : memref<2x1024xbf16, #tpu.memory_space<vmem>>, vector<2x1024xbf16>
    %c0_4 = arith.constant 0 : index
    %c0_5 = arith.constant 0 : index
    %5 = vector.load %arg3[%c0_4, %c0_5] : memref<32x1024xbf16, #tpu.memory_space<vmem>>, vector<32x1024xbf16>
    %cst = arith.constant dense<0.000000e+00> : vector<2x32xf32>
    %6 = tpu.matmul %4, %5, %cst {dimension_numbers = #tpu.dot_dimension_numbers<[1], [1], [0], [0], [0, 0, 1, 0], [], []>} : vector<2x1024xbf16>, vector<32x1024xbf16>, vector<2x32xf32> -> vector<2x32xf32>
    %7 = arith.addf %3, %6 : vector<2x32xf32>
    %c0_6 = arith.constant 0 : index
    %c0_7 = arith.constant 0 : index
    %8 = vector.load %arg6[%c0_6, %c0_7] : memref<2x32xf32, #tpu.memory_space<vmem>>, vector<2x32xf32>
    tpu.vector_store %arg6[%c0_6, %c0_7], %7 {strides = array<i32>} : memref<2x32xf32, #tpu.memory_space<vmem>>, vector<2x32xf32>,
    %c0_i32_8 = arith.constant 0 : i32
    %9 = arith.cmpi eq, %arg1, %c0_i32_8 : i32
    %10 = arith.extui %9 : i1 to i32
    %c0_i32_9 = arith.constant 0 : i32
    %11 = arith.cmpi ne, %10, %c0_i32_9 : i32
    scf.if %11 {
      %c0_i32_10 = arith.constant 0 : i32
      %12 = arith.cmpi eq, %arg0, %c0_i32_10 : i32
      %c0_11 = arith.constant 0 : index
      %c0_12 = arith.constant 0 : index
      %13 = vector.load %arg4[%c0_11, %c0_12] : memref<1x32xf32, #tpu.memory_space<vmem>>, vector<1x32xf32>
      %cst_13 = arith.constant 0.000000e+00 : f32
      %14 = vector.broadcast %cst_13 : f32 to vector<1x32xf32>
      %15 = arith.select %12, %13, %14 : vector<1x32xf32>
      %c0_14 = arith.constant 0 : index
      %c0_15 = arith.constant 0 : index
      %16 = vector.load %arg6[%c0_14, %c0_15] : memref<2x32xf32, #tpu.memory_space<vmem>>, vector<2x32xf32>
      %17 = vector.broadcast %15 : vector<1x32xf32> to vector<2x32xf32>
      %18 = arith.addf %16, %17 : vector<2x32xf32>
      %c0_16 = arith.constant 0 : index
      %c0_17 = arith.constant 0 : index
      %c0_18 = arith.constant 0 : index
      %19 = vector.load %arg5[%c0_16, %c0_17, %c0_18] : memref<1x2x32xf32, #tpu.memory_space<vmem>>, vector<1x2x32xf32>
      %20 = vector.shape_cast %19 : vector<1x2x32xf32> to vector<2x32xf32>
      %21 = vector.shape_cast %18 : vector<2x32xf32> to vector<1x2x32xf32>
      tpu.vector_store %arg5[%c0_16, %c0_17, %c0_18], %21 {strides = array<i32>} : memref<1x2x32xf32, #tpu.memory_space<vmem>>, vector<1x2x32xf32>,
    } else {
    }
    return
  }
  func.func @transform_0(%arg0: i32, %arg1: i32) -> (i32, i32) {
    %c1_i32 = arith.constant 1 : i32
    %0 = arith.muli %arg0, %c1_i32 : i32
    %1 = arith.addi %0, %arg1 : i32
    %c0_i32 = arith.constant 0 : i32
    %c0_i32_0 = arith.constant 0 : i32
    return %c0_i32, %1 : i32, i32
  }
  func.func @transform_1(%arg0: i32, %arg1: i32) -> (i32, i32) {
    %c1_i32 = arith.constant 1 : i32
    %0 = arith.muli %arg0, %c1_i32 : i32
    %1 = arith.addi %0, %arg1 : i32
    %c0_i32 = arith.constant 0 : i32
    %c0_i32_0 = arith.constant 0 : i32
    return %c0_i32, %1 : i32, i32
  }
  func.func @transform_2(%arg0: i32, %arg1: i32) -> (i32, i32) {
    %c0_i32 = arith.constant 0 : i32
    %c0_i32_0 = arith.constant 0 : i32
    %c0_i32_1 = arith.constant 0 : i32
    return %c0_i32, %c0_i32_0 : i32, i32
  }
  func.func @transform_3(%arg0: i32, %arg1: i32) -> (i32, i32, i32) {
    %c0_i32 = arith.constant 0 : i32
    %c0_i32_0 = arith.constant 0 : i32
    %c0_i32_1 = arith.constant 0 : i32
    return %arg0, %c0_i32, %c0_i32_0 : i32, i32, i32
  }
}

</mosaic_0001>

<llo_original>
// kernel: encode_fc_pallas.1
$region0: #{encode_fc_pallas.1}
  #allocation0 [shape = 'u32[]', space=smem, size = 0x4, offset = 0x4, fixed_abs, tag = 'smem constant byte address 0x4 - core index']
  #allocation1 [shape = 'u32[144,128]{1,0:T(1,128)}', space=vmem, size = 0x12000, scoped, tag = 'internal scratch']
  #allocation2 [shape = 'f32[2,32]{1,0:T(2,128)}', space=vmem, size = 0x400, scoped, tag = 'scratch operand']
  %s0 = inlined_call_operand.vmem [shape: bf16[2,2048], index: 0, kind: input, shape index: {}]
  %s1 = inlined_call_operand.hbm [shape: bf16[32,2048], index: 1, kind: input, shape index: {}]
  %s2 = inlined_call_operand.vmem [shape: f32[1,32], index: 2, kind: input, shape index: {}]
  %s3 = inlined_call_operand.vmem [shape: f32[2,2,32], index: 3, kind: output, shape index: {}]
  %s4 = sld [smem:[#allocation0]]
  $region57: #{encode_fc_pallas.1} parent=0
    _
  %s6 = ssub.s32 1, %s4
  %s7 = scalar_select 0, %s6, %s4
  $region1: #{encode_fc_pallas.1} parent=0
    #allocation3 [shape = 'u8[131072]{0}', space=vmem, size = 0x20000, scoped, tag = 'input window, operand 1']
    #allocation4 [shape = 's32[2]{0}', space=sflag, size = 0x8, scoped, tag = 'scoped memory for encode_fc_pallas.1']
    %8 = vsyncpa [#allocation4], 0
    %s9 = scalar_lea.sflag [#allocation4], 1
    %10 = vsyncpa %s9, 0
    loop: start=0, step=1, limit=4
    $region2: #{encode_fc_pallas.1} parent=1 // loop_pre_header
      _
    $region3: #{encode_fc_pallas.1} parent=1 // loop_header
      %s12 = sphi 0, %s16
      %p13 = scmp.ge.s32.totalorder %s12, 4
      %s19 = sphi 0, %s31
      %s20 = sphi 0, %s27
      %s21 = sphi 0, %s19
      %s22 = sphi 0, %s20
      %s23 = sphi 0, %s21
      %s24 = sphi 0, %s22
      %s36 = sphi 0, %s38
      %s39 = sphi 0, %s36
      %s40 = sphi 0, %s39
      %s56 = sphi 0, %s40
      %s64 = sphi 0, %s66
      %s67 = sphi 0, %s64
      %s68 = sphi 0, %s67
      %s84 = sphi 0, %s68
      %s88 = sphi 0, %s88
      %s90 = sphi 0, %s88
      %s91 = sphi 0, %s90
      %s105 = sphi 0, %s91
      %s111 = sphi 0, %s113
      %s114 = sphi 0, %s111
      %s115 = sphi 0, %s114
      %s131 = sphi 0, %s115
    $region4: #{encode_fc_pallas.1} parent=1 // loop_header_branch
      %15 = sbr.rel (%p13) target = $region8
    $region5: #{encode_fc_pallas.1} parent=1 // loop_body
      %s17 = ssub.s32 %s12, 1
      %s18 = ssub.s32 %s12, 2
      %s25 = sadd.s32 1, %s20
      %p26 = scmp.ge.s32.totalorder %s25, 1
      %s27 = scalar_select %p26, 0, %s25
      %s28 = sadd.s32 1, %s19
      %s29 = scalar_select %p26, %s28, %s19
      %p30 = scmp.ge.s32.totalorder %s29, 2
      %s31 = scalar_select %p30, 0, %s29
      %s32 = sadd.s32 %s19, %s20
      %s33 = sadd.s32 %s31, %s27
      %s34 = ssub.s32 %s32, %s33
      %p35 = scmp.eq.s32.totalorder %s34, 0
      %s37 = sadd.s32 %s36, 1
      %s38 = scalar_select %p35, %s36, %s37
      %p41 = pneg %p35
      %p42 = scmp.eq.s32.totalorder %s12, 1
      %p43 = por %p41, %p42
      %p44 = scmp.ne.s32.totalorder %s36, %s39
      %p45 = scmp.eq.s32.totalorder %s12, 0
      %p46 = por %p44, %p45
      %p47 = scmp.ne.s32.totalorder %s36, %s39
      %p48 = scmp.eq.s32.totalorder %s17, 1
      %p49 = por %p47, %p48
      %p50 = scmp.ne.s32.totalorder %s39, %s40
      %p51 = scmp.eq.s32.totalorder %s17, 0
      %p52 = por %p50, %p51
      %p53 = scmp.ne.s32.totalorder %s39, %s40
      %p54 = scmp.eq.s32.totalorder %s18, 1
      %p55 = por %p53, %p54
      %p57 = scmp.ne.s32.totalorder %s40, %s56
      %p58 = scmp.eq.s32.totalorder %s18, 0
      %p59 = por %p57, %p58
      %s60 = sadd.s32 %s19, %s20
      %s61 = sadd.s32 %s31, %s27
      %s62 = ssub.s32 %s60, %s61
      %p63 = scmp.eq.s32.totalorder %s62, 0
      %s65 = sadd.s32 %s64, 1
      %s66 = scalar_select %p63, %s64, %s65
      %p69 = pneg %p63
      %p70 = scmp.eq.s32.totalorder %s12, 1
      %p71 = por %p69, %p70
      %p72 = scmp.ne.s32.totalorder %s64, %s67
      %p73 = scmp.eq.s32.totalorder %s12, 0
      %p74 = por %p72, %p73
      %p75 = scmp.ne.s32.totalorder %s64, %s67
      %p76 = scmp.eq.s32.totalorder %s17, 1
      %p77 = por %p75, %p76
      %p78 = scmp.ne.s32.totalorder %s67, %s68
      %p79 = scmp.eq.s32.totalorder %s17, 0
      %p80 = por %p78, %p79
      %p81 = scmp.ne.s32.totalorder %s67, %s68
      %p82 = scmp.eq.s32.totalorder %s18, 1
      %p83 = por %p81, %p82
      %p85 = scmp.ne.s32.totalorder %s68, %s84
      %p86 = scmp.eq.s32.totalorder %s18, 0
      %p87 = por %p85, %p86
      %s89 = sadd.s32 %s88, 1
      %p92 = scmp.eq.s32.totalorder %s12, 1
      %p93 = scmp.ne.s32.totalorder %s88, %s90
      %p94 = scmp.eq.s32.totalorder %s12, 0
      %p95 = por %p93, %p94
      %p96 = scmp.ne.s32.totalorder %s88, %s90
      %p97 = scmp.eq.s32.totalorder %s17, 1
      %p98 = por %p96, %p97
      %p99 = scmp.ne.s32.totalorder %s90, %s91
      %p100 = scmp.eq.s32.totalorder %s17, 0
      %p101 = por %p99, %p100
      %p102 = scmp.ne.s32.totalorder %s90, %s91
      %p103 = scmp.eq.s32.totalorder %s18, 1
      %p104 = por %p102, %p103
      %p106 = scmp.ne.s32.totalorder %s91, %s105
      %p107 = scmp.eq.s32.totalorder %s18, 0
      %p108 = por %p106, %p107
      %s109 = ssub.s32 %s19, %s31
      %p110 = scmp.eq.s32.totalorder %s109, 0
      %s112 = sadd.s32 %s111, 1
      %s113 = scalar_select %p110, %s111, %s112
      %p116 = pneg %p110
      %p117 = scmp.eq.s32.totalorder %s12, 1
      %p118 = por %p116, %p117
      %p119 = scmp.ne.s32.totalorder %s111, %s114
      %p120 = scmp.eq.s32.totalorder %s12, 0
      %p121 = por %p119, %p120
      %p122 = scmp.ne.s32.totalorder %s111, %s114
      %p123 = scmp.eq.s32.totalorder %s17, 1
      %p124 = por %p122, %p123
      %p125 = scmp.ne.s32.totalorder %s114, %s115
      %p126 = scmp.eq.s32.totalorder %s17, 0
      %p127 = por %p125, %p126
      %p128 = scmp.ne.s32.totalorder %s114, %s115
      %p129 = scmp.eq.s32.totalorder %s18, 1
      %p130 = por %p128, %p129
      %p132 = scmp.ne.s32.totalorder %s115, %s131
      %p133 = scmp.eq.s32.totalorder %s18, 0
      %p134 = por %p132, %p133
      %p135 = scmp.le.s32.totalorder 1, %s12
      %p136 = scmp.lt.s32.totalorder %s12, 3
      %p137 = pnand %p135, %p136
      %p138 = pneg %p137
      // Predicated region
      $region9: #{encode_fc_pallas.1} parent=5 // pred_check
        _
      $region10: #{encode_fc_pallas.1} parent=5 // pred_check_branch
        %140 = sbr.rel (%p137) target = $region12
      $region11: #{encode_fc_pallas.1} parent=5 // pred_region
        %s141 = ssub.s32 %s12, 1
        // Predicated region
        $region13: #{encode_fc_pallas.1} parent=11 // pred_check
          %p142 = pneg %p101
        $region14: #{encode_fc_pallas.1} parent=11 // pred_check_branch
          %144 = sbr.rel (%p142) target = $region16
        $region15: #{encode_fc_pallas.1} parent=11 // pred_region
          _
        $region16: #{encode_fc_pallas.1} parent=11 // pred_fallthru
          _
      $region12: #{encode_fc_pallas.1} parent=5 // pred_fallthru
        _
      %p145 = scmp.lt.s32.totalorder %s12, 2
      // Predicated region
      $region17: #{encode_fc_pallas.1} parent=5 // pred_check
        %p146 = pneg %p145
      $region18: #{encode_fc_pallas.1} parent=5 // pred_check_branch
        %148 = sbr.rel (%p146) target = $region20
      $region19: #{encode_fc_pallas.1} parent=5 // pred_region
        // Predicated region
        $region21: #{encode_fc_pallas.1} parent=19 // pred_check
          %p149 = pneg %p46
        $region22: #{encode_fc_pallas.1} parent=19 // pred_check_branch
          %151 = sbr.rel (%p149) target = $region24
        $region23: #{encode_fc_pallas.1} parent=19 // pred_region
          %s152 = sadd.s32 %s19, %s20
          %s153 = smul.u32 8, %s152
          %p154 = scmp.lt.s32.totalorder %s153, 15
          %s155 = scalar_select %p154, %s153, 15
          %s156 = scalar_lea.vmem %s0, %s155
          %s157 = sadd.s32 %s19, %s20
          %s158 = smul.u32 8, %s157
        $region24: #{encode_fc_pallas.1} parent=19 // pred_fallthru
          _
        // Predicated region
        $region25: #{encode_fc_pallas.1} parent=19 // pred_check
          %p159 = pneg %p74
        $region26: #{encode_fc_pallas.1} parent=19 // pred_check_branch
          %161 = sbr.rel (%p159) target = $region28
        $region27: #{encode_fc_pallas.1} parent=19 // pred_region
          %s162 = sand.u32 %s64, 1
          %s163 = scalar_lea.sflag [#allocation4], %s162
          %s164 = sand.u32 %s64, 1
          %s165 = smul.addr %s164, 128
          %s166 = scalar_lea.vmem [#allocation3], %s165
          %s167 = sadd.s32 %s19, %s20
          %s168 = smul.u32 8, %s167
          %s170 = ssub.s32 2048, 2048
          %171 = vsyncadd %s163, %s170
          %s172 = smul.addr %s168, 64
          %s173 = scalar_lea.hbm %s1, %s172
          %s174 = sshll.u32 %s166, 4
          %s175 = int_to_ptr.vmem [resolvable:$true] %s174
          %180 = dma.hbm_to_vmem [thread:$0]  %s173, 2048, %s175, %s163, 1024, 512, 32
        $region28: #{encode_fc_pallas.1} parent=19 // pred_fallthru
          _
      $region20: #{encode_fc_pallas.1} parent=5 // pred_fallthru
        _
      %p181 = scmp.le.s32.totalorder 1, %s12
      %p182 = scmp.lt.s32.totalorder %s12, 3
      %p183 = pnand %p181, %p182
      %p184 = pneg %p183
      // Predicated region
      $region29: #{encode_fc_pallas.1} parent=5 // pred_check
        _
      $region30: #{encode_fc_pallas.1} parent=5 // pred_check_branch
        %186 = sbr.rel (%p183) target = $region32
      $region31: #{encode_fc_pallas.1} parent=5 // pred_region
        %s187 = ssub.s32 %s12, 1
        %s188 = sand.u32 %s67, 1
        %s189 = scalar_lea.sflag [#allocation4], %s188
        %s190 = sand.u32 %s67, 1
        %s191 = smul.addr %s190, 128
        %s192 = scalar_lea.vmem [#allocation3], %s191
        // Predicated region
        $region33: #{encode_fc_pallas.1} parent=31 // pred_check
          %p193 = pneg %p80
        $region34: #{encode_fc_pallas.1} parent=31 // pred_check_branch
          %195 = sbr.rel (%p193) target = $region36
        $region35: #{encode_fc_pallas.1} parent=31 // pred_region
          %196 = dma.done %s189, 2048
        $region36: #{encode_fc_pallas.1} parent=31 // pred_fallthru
          _
        %s197 = sadd.s32 %s21, %s22
        %s198 = smul.u32 8, %s197
        %p199 = scmp.lt.s32.totalorder %s198, 15
        %s200 = scalar_select %p199, %s198, 15
        %s201 = scalar_lea.vmem %s0, %s200
        %p202 = pneg %p52
        %p203 = pneg %p49
        %s204 = sand.u32 %s67, 1
        %s205 = scalar_lea.sflag [#allocation4], %s204
        %s206 = sand.u32 %s67, 1
        %s207 = smul.addr %s206, 128
        %s208 = scalar_lea.vmem [#allocation3], %s207
        %p209 = pneg %p80
        %p210 = pneg %p77
        %p211 = pneg %p101
        %p212 = pneg %p98
        %p213 = pneg %p127
        %p214 = pneg %p124
        %p215 = scmp.lt.s32.totalorder %s21, 1
        %s216 = scalar_select %p215, %s21, 1
        %s217 = smul.addr %s216, 2
        %s218 = scalar_lea.vmem %s3, %s217
        %s219 = sadd.s32 %s21, %s22
        %s220 = smul.u32 8, %s219
        %p221 = scmp.lt.s32.totalorder %s220, 15
        %s222 = scalar_select %p221, %s220, 15
        %s223 = scalar_lea.vmem %s0, %s222
        %s224 = sadd.s32 %s21, %s22
        %s225 = smul.u32 8, %s224
        %s226 = sadd.s32 %s21, %s22
        %s227 = smul.u32 8, %s226
        %p228 = scmp.lt.s32.totalorder %s21, 1
        %s229 = scalar_select %p228, %s21, 1
        %s230 = smul.addr %s229, 2
        %s231 = scalar_lea.vmem %s3, %s230
        %p233 = scmp.eq.s32.totalorder %s22, 0
        // Predicated region
        $region37: #{encode_fc_pallas.1} parent=31 // pred_check
          %p234 = pneg %p233
        $region38: #{encode_fc_pallas.1} parent=31 // pred_check_branch
          %236 = sbr.rel (%p234) target = $region40
        $region39: #{encode_fc_pallas.1} parent=31 // pred_region
          %vm237 = vcmask 254976
          %238 = vst.msk [vmem:[#allocation2] sm:$0x3] %vm237, 0.0
        $region40: #{encode_fc_pallas.1} parent=31 // pred_fallthru
          _
        %v239 = vld [vmem:[#allocation2] sm:$0x3]
        %v240 = vld [vmem:[%s223] sm:$0xff]
        %v241 = vld [vmem:[%s192] sm:$0xff]
        %v242 = vld [vmem:[%s192 + $0x8] sm:$0xff]
        %v243 = vld [vmem:[%s192 + $0x10] sm:$0xff]
        %v244 = vld [vmem:[%s192 + $0x18] sm:$0xff]
        %v245 = vld [vmem:[%s192 + $0x20] sm:$0xff]
        %v246 = vld [vmem:[%s192 + $0x28] sm:$0xff]
        %v247 = vld [vmem:[%s192 + $0x30] sm:$0xff]
        %v248 = vld [vmem:[%s192 + $0x38] sm:$0xff]
        %v249 = vld [vmem:[%s192 + $0x40] sm:$0xff]
        %v250 = vld [vmem:[%s192 + $0x48] sm:$0xff]
        %v251 = vld [vmem:[%s192 + $0x50] sm:$0xff]
        %v252 = vld [vmem:[%s192 + $0x58] sm:$0xff]
        %v253 = vld [vmem:[%s192 + $0x60] sm:$0xff]
        %v254 = vld [vmem:[%s192 + $0x68] sm:$0xff]
        %v255 = vld [vmem:[%s192 + $0x70] sm:$0xff]
        %v256 = vld [vmem:[%s192 + $0x78] sm:$0xff]
        %v258 = vcombine.high %v240, %v240
        %v260 = vunpack.c.l.s4 1966171168
        %v261 = vunpack.c.0.s8 %v260
        %v262 = vlaneseq
        %v263 = vshrl.u32 %v262, 7
        %v264 = vsub.s32 %v261, %v263
        %v265 = vrot.slane %v240, %v264
        %v267 = vunpack.c.l.s4 1966171168
        %v268 = vunpack.c.0.s8 %v267
        %v269 = vlaneseq
        %v270 = vshrl.u32 %v269, 7
        %v271 = vsub.s32 %v268, %v270
        %v272 = vrot.slane %v258, %v271
        %v273 = vcombine.high %v265, %v265
        %v274 = vcombine.high %v272, %v272
        %v276 = vunpack.c.l.s4 1966171168
        %v277 = vunpack.c.0.s8 %v276
        %v278 = vlaneseq
        %v279 = vshrl.u32 %v278, 7
        %v280 = vsub.s32 %v277, %v279
        %v281 = vrot.slane %v265, %v280
        %v283 = vunpack.c.l.s4 1966171168
        %v284 = vunpack.c.0.s8 %v283
        %v285 = vlaneseq
        %v286 = vshrl.u32 %v285, 7
        %v287 = vsub.s32 %v284, %v286
        %v288 = vrot.slane %v272, %v287
        %v290 = vunpack.c.l.s4 1966171168
        %v291 = vunpack.c.0.s8 %v290
        %v292 = vlaneseq
        %v293 = vshrl.u32 %v292, 7
        %v294 = vsub.s32 %v291, %v293
        %v295 = vrot.slane %v273, %v294
        %v297 = vunpack.c.l.s4 1966171168
        %v298 = vunpack.c.0.s8 %v297
        %v299 = vlaneseq
        %v300 = vshrl.u32 %v299, 7
        %v301 = vsub.s32 %v298, %v300
        %v302 = vrot.slane %v274, %v301
        %v303 = vcombine.high %v281, %v281
        %v304 = vcombine.high %v288, %v288
        %v305 = vcombine.high %v295, %v295
        %v306 = vcombine.high %v302, %v302
        %v331 = vunpack.c.l.b16 %v241
        %v332 = vunpack.c.h.b16 %v241
        %v333 = vunpack.c.l.b16 %v242
        %v334 = vunpack.c.h.b16 %v242
        %v335 = vunpack.c.l.b16 %v243
        %v336 = vunpack.c.h.b16 %v243
        %v337 = vunpack.c.l.b16 %v244
        %v338 = vunpack.c.h.b16 %v244
        %v339 = vunpack.c.l.b16 %v245
        %v340 = vunpack.c.h.b16 %v245
        %v341 = vunpack.c.l.b16 %v246
        %v342 = vunpack.c.h.b16 %v246
        %v343 = vunpack.c.l.b16 %v247
        %v344 = vunpack.c.h.b16 %v247
        %v345 = vunpack.c.l.b16 %v248
        %v346 = vunpack.c.h.b16 %v248
        %v347 = vunpack.c.l.b16 %v249
        %v348 = vunpack.c.h.b16 %v249
        %v349 = vunpack.c.l.b16 %v250
        %v350 = vunpack.c.h.b16 %v250
        %v351 = vunpack.c.l.b16 %v251
        %v352 = vunpack.c.h.b16 %v251
        %v353 = vunpack.c.l.b16 %v252
        %v354 = vunpack.c.h.b16 %v252
        %v355 = vunpack.c.l.b16 %v253
        %v356 = vunpack.c.h.b16 %v253
        %v357 = vunpack.c.l.b16 %v254
        %v358 = vunpack.c.h.b16 %v254
        %v359 = vunpack.c.l.b16 %v255
        %v360 = vunpack.c.h.b16 %v255
        %v361 = vunpack.c.l.b16 %v256
        %v362 = vunpack.c.h.b16 %v256
        %v363 = vpack.c.b16 %v339, %v331
        %v364 = vpack.c.b16 %v340, %v332
        %v365 = vpack.c.b16 %v341, %v333
        %v366 = vpack.c.b16 %v342, %v334
        %v367 = vpack.c.b16 %v343, %v335
        %v368 = vpack.c.b16 %v344, %v336
        %v369 = vpack.c.b16 %v345, %v337
        %v370 = vpack.c.b16 %v346, %v338
        %v371 = vpack.c.b16 %v355, %v347
        %v372 = vpack.c.b16 %v356, %v348
        %v373 = vpack.c.b16 %v357, %v349
        %v374 = vpack.c.b16 %v358, %v350
        %v375 = vpack.c.b16 %v359, %v351
        %v376 = vpack.c.b16 %v360, %v352
        %v377 = vpack.c.b16 %v361, %v353
        %v378 = vpack.c.b16 %v362, %v354
        %395 = vmatprep.subr.bf16.mxu0 %v364
        %396 = vmatpush1.bf16.xpose.msra.mxu0 %v363
        %397 = vmatprep.subr.bf16.mxu0 %v372
        %398 = vmatpush1.bf16.xpose.msra.mxu0 %v371
        %399 = vmatprep.subr.bf16.mxu0 0
        %400 = vmatpush1.bf16.xpose.msra.mxu0 0
        %401 = vmatprep.subr.bf16.mxu0 0
        %402 = vmatpush1.bf16.xpose.msra.mxu0 0
        %403 = vmatprep.subr.bf16.mxu0 0
        %404 = vmatpush1.bf16.xpose.msra.mxu0 0
        %405 = vmatprep.subr.bf16.mxu0 0
        %406 = vmatpush1.bf16.xpose.msra.mxu0 0
        %407 = vmatprep.subr.bf16.mxu0 0
        %408 = vmatpush1.bf16.xpose.msra.mxu0 0
        %409 = vmatprep.subr.bf16.mxu0 0
        %410 = vmatpush1.bf16.xpose.msra.mxu0 0
        %411 = vmatprep.subr.bf16.mxu0 0
        %412 = vmatpush1.bf16.xpose.msra.mxu0 0
        %413 = vmatprep.subr.bf16.mxu0 0
        %414 = vmatpush1.bf16.xpose.msra.mxu0 0
        %415 = vmatprep.subr.bf16.mxu0 0
        %416 = vmatpush1.bf16.xpose.msra.mxu0 0
        %417 = vmatprep.subr.bf16.mxu0 0
        %418 = vmatpush1.bf16.xpose.msra.mxu0 0
        %419 = vmatprep.subr.bf16.mxu0 0
        %420 = vmatpush1.bf16.xpose.msra.mxu0 0
        %421 = vmatprep.subr.bf16.mxu0 0
        %422 = vmatpush1.bf16.xpose.msra.mxu0 0
        %423 = vmatprep.subr.bf16.mxu0 0
        %424 = vmatpush1.bf16.xpose.msra.mxu0 0
        %425 = vmatprep.subr.bf16.mxu0 0
        %426 = vmatpush1.bf16.xpose.msra.mxu0 0
        %427 = vmatprep.mubr.bf16.mxu0 %v295
        %428 = vmatmul.mubr.bf16.gmra.mrb[0].mxu0 %v281
        %v429 = vpop.f32.mrb[0].mxu0
        %v430 = vadd.f32 0.0, %v429
        %v431 = vpop.f32.mrb[0].mxu0
        %v432 = vpop.f32.mrb[0].mxu0
        %v433 = vpop.f32.mrb[0].mxu0
        %434 = vdwg.mxu0
        %435 = vmatprep.subr.bf16.mxu0 %v366
        %436 = vmatpush1.bf16.xpose.msra.mxu0 %v365
        %437 = vmatprep.subr.bf16.mxu0 %v374
        %438 = vmatpush1.bf16.xpose.msra.mxu0 %v373
        %439 = vmatprep.subr.bf16.mxu0 0
        %440 = vmatpush1.bf16.xpose.msra.mxu0 0
        %441 = vmatprep.subr.bf16.mxu0 0
        %442 = vmatpush1.bf16.xpose.msra.mxu0 0
        %443 = vmatprep.subr.bf16.mxu0 0
        %444 = vmatpush1.bf16.xpose.msra.mxu0 0
        %445 = vmatprep.subr.bf16.mxu0 0
        %446 = vmatpush1.bf16.xpose.msra.mxu0 0
        %447 = vmatprep.subr.bf16.mxu0 0
        %448 = vmatpush1.bf16.xpose.msra.mxu0 0
        %449 = vmatprep.subr.bf16.mxu0 0
        %450 = vmatpush1.bf16.xpose.msra.mxu0 0
        %451 = vmatprep.subr.bf16.mxu0 0
        %452 = vmatpush1.bf16.xpose.msra.mxu0 0
        %453 = vmatprep.subr.bf16.mxu0 0
        %454 = vmatpush1.bf16.xpose.msra.mxu0 0
        %455 = vmatprep.subr.bf16.mxu0 0
        %456 = vmatpush1.bf16.xpose.msra.mxu0 0
        %457 = vmatprep.subr.bf16.mxu0 0
        %458 = vmatpush1.bf16.xpose.msra.mxu0 0
        %459 = vmatprep.subr.bf16.mxu0 0
        %460 = vmatpush1.bf16.xpose.msra.mxu0 0
        %461 = vmatprep.subr.bf16.mxu0 0
        %462 = vmatpush1.bf16.xpose.msra.mxu0 0
        %463 = vmatprep.subr.bf16.mxu0 0
        %464 = vmatpush1.bf16.xpose.msra.mxu0 0
        %465 = vmatprep.subr.bf16.mxu0 0
        %466 = vmatpush1.bf16.xpose.msra.mxu0 0
        %467 = vmatprep.mubr.bf16.mxu0 %v305
        %468 = vmatmul.mubr.bf16.gmra.mrb[0].mxu0 %v303
        %v469 = vpop.f32.mrb[0].mxu0
        %v470 = vadd.f32 %v430, %v469
        %v471 = vpop.f32.mrb[0].mxu0
        %v472 = vpop.f32.mrb[0].mxu0
        %v473 = vpop.f32.mrb[0].mxu0
        %474 = vdwg.mxu0
        %475 = vmatprep.subr.bf16.mxu0 %v368
        %476 = vmatpush1.bf16.xpose.msra.mxu0 %v367
        %477 = vmatprep.subr.bf16.mxu0 %v376
        %478 = vmatpush1.bf16.xpose.msra.mxu0 %v375
        %479 = vmatprep.subr.bf16.mxu0 0
        %480 = vmatpush1.bf16.xpose.msra.mxu0 0
        %481 = vmatprep.subr.bf16.mxu0 0
        %482 = vmatpush1.bf16.xpose.msra.mxu0 0
        %483 = vmatprep.subr.bf16.mxu0 0
        %484 = vmatpush1.bf16.xpose.msra.mxu0 0
        %485 = vmatprep.subr.bf16.mxu0 0
        %486 = vmatpush1.bf16.xpose.msra.mxu0 0
        %487 = vmatprep.subr.bf16.mxu0 0
        %488 = vmatpush1.bf16.xpose.msra.mxu0 0
        %489 = vmatprep.subr.bf16.mxu0 0
        %490 = vmatpush1.bf16.xpose.msra.mxu0 0
        %491 = vmatprep.subr.bf16.mxu0 0
        %492 = vmatpush1.bf16.xpose.msra.mxu0 0
        %493 = vmatprep.subr.bf16.mxu0 0
        %494 = vmatpush1.bf16.xpose.msra.mxu0 0
        %495 = vmatprep.subr.bf16.mxu0 0
        %496 = vmatpush1.bf16.xpose.msra.mxu0 0
        %497 = vmatprep.subr.bf16.mxu0 0
        %498 = vmatpush1.bf16.xpose.msra.mxu0 0
        %499 = vmatprep.subr.bf16.mxu0 0
        %500 = vmatpush1.bf16.xpose.msra.mxu0 0
        %501 = vmatprep.subr.bf16.mxu0 0
        %502 = vmatpush1.bf16.xpose.msra.mxu0 0
        %503 = vmatprep.subr.bf16.mxu0 0
        %504 = vmatpush1.bf16.xpose.msra.mxu0 0
        %505 = vmatprep.subr.bf16.mxu0 0
        %506 = vmatpush1.bf16.xpose.msra.mxu0 0
        %507 = vmatprep.mubr.bf16.mxu0 %v302
        %508 = vmatmul.mubr.bf16.gmra.mrb[0].mxu0 %v288
        %v509 = vpop.f32.mrb[0].mxu0
        %v510 = vadd.f32 %v470, %v509
        %v511 = vpop.f32.mrb[0].mxu0
        %v512 = vpop.f32.mrb[0].mxu0
        %v513 = vpop.f32.mrb[0].mxu0
        %514 = vdwg.mxu0
        %515 = vmatprep.subr.bf16.mxu0 %v370
        %516 = vmatpush1.bf16.xpose.msra.mxu0 %v369
        %517 = vmatprep.subr.bf16.mxu0 %v378
        %518 = vmatpush1.bf16.xpose.msra.mxu0 %v377
        %519 = vmatprep.subr.bf16.mxu0 0
        %520 = vmatpush1.bf16.xpose.msra.mxu0 0
        %521 = vmatprep.subr.bf16.mxu0 0
        %522 = vmatpush1.bf16.xpose.msra.mxu0 0
        %523 = vmatprep.subr.bf16.mxu0 0
        %524 = vmatpush1.bf16.xpose.msra.mxu0 0
        %525 = vmatprep.subr.bf16.mxu0 0
        %526 = vmatpush1.bf16.xpose.msra.mxu0 0
        %527 = vmatprep.subr.bf16.mxu0 0
        %528 = vmatpush1.bf16.xpose.msra.mxu0 0
        %529 = vmatprep.subr.bf16.mxu0 0
        %530 = vmatpush1.bf16.xpose.msra.mxu0 0
        %531 = vmatprep.subr.bf16.mxu0 0
        %532 = vmatpush1.bf16.xpose.msra.mxu0 0
        %533 = vmatprep.subr.bf16.mxu0 0
        %534 = vmatpush1.bf16.xpose.msra.mxu0 0
        %535 = vmatprep.subr.bf16.mxu0 0
        %536 = vmatpush1.bf16.xpose.msra.mxu0 0
        %537 = vmatprep.subr.bf16.mxu0 0
        %538 = vmatpush1.bf16.xpose.msra.mxu0 0
        %539 = vmatprep.subr.bf16.mxu0 0
        %540 = vmatpush1.bf16.xpose.msra.mxu0 0
        %541 = vmatprep.subr.bf16.mxu0 0
        %542 = vmatpush1.bf16.xpose.msra.mxu0 0
        %543 = vmatprep.subr.bf16.mxu0 0
        %544 = vmatpush1.bf16.xpose.msra.mxu0 0
        %545 = vmatprep.subr.bf16.mxu0 0
        %546 = vmatpush1.bf16.xpose.msra.mxu0 0
        %547 = vmatprep.mubr.bf16.mxu0 %v306
        %548 = vmatmul.mubr.bf16.gmra.mrb[0].mxu0 %v304
        %v549 = vpop.f32.mrb[0].mxu0
        %v550 = vadd.f32 %v510, %v549
        %v551 = vpop.f32.mrb[0].mxu0
        %v552 = vpop.f32.mrb[0].mxu0
        %v553 = vpop.f32.mrb[0].mxu0
        %554 = vdwg.mxu0
        %v555 = vadd.f32 %v239, %v550
        %vm556 = vcmask 254976
        %557 = vst.msk [vmem:[#allocation2] sm:$0x3] %vm556, %v555
        // Predicated region
        $region41: #{encode_fc_pallas.1} parent=31 // pred_check
          %p558 = pneg %p233
        $region42: #{encode_fc_pallas.1} parent=31 // pred_check_branch
          %560 = sbr.rel (%p558) target = $region44
        $region43: #{encode_fc_pallas.1} parent=31 // pred_region
          %p561 = scmp.eq.s32.totalorder %s21, 0
          %v562 = vld [vmem:[%s2] sm:$0x1]
          %s563 = scalar_select %p561, 1, 0
          %v564 = vstv %s563
          %vm565 = vcmp.eq.s32.totalorder %v564, 1
          %v566 = vsel %vm565, %v562, 0.0
          %v567 = vld [vmem:[#allocation2] sm:$0x3]
          %v569 = vlaneseq
          %v570 = vshrl.u32 %v569, 7
          %v571 = vsub.s32 0, %v570
          %v572 = vrot.slane %v566, %v571
          %v574 = vadd.f32 %v567, %v572
          %575 = vst.msk [vmem:[%s231] sm:$0x3] %vm556, %v574
        $region44: #{encode_fc_pallas.1} parent=31 // pred_fallthru
          _
        %p576 = scmp.lt.s32.totalorder %s21, 1
        %s577 = scalar_select %p576, %s21, 1
        %s578 = smul.addr %s577, 2
        %s579 = scalar_lea.vmem %s3, %s578
        // Predicated region
        $region45: #{encode_fc_pallas.1} parent=31 // pred_check
          %p580 = pneg %p124
        $region46: #{encode_fc_pallas.1} parent=31 // pred_check_branch
          %582 = sbr.rel (%p580) target = $region48
        $region47: #{encode_fc_pallas.1} parent=31 // pred_region
          _
        $region48: #{encode_fc_pallas.1} parent=31 // pred_fallthru
          _
      $region32: #{encode_fc_pallas.1} parent=5 // pred_fallthru
        _
      %p583 = scmp.le.s32.totalorder 2, %s12
      // Predicated region
      $region49: #{encode_fc_pallas.1} parent=5 // pred_check
        %p584 = pneg %p583
      $region50: #{encode_fc_pallas.1} parent=5 // pred_check_branch
        %586 = sbr.rel (%p584) target = $region52
      $region51: #{encode_fc_pallas.1} parent=5 // pred_region
        %s587 = ssub.s32 %s12, 2
        // Predicated region
        $region53: #{encode_fc_pallas.1} parent=51 // pred_check
          %p588 = pneg %p130
        $region54: #{encode_fc_pallas.1} parent=51 // pred_check_branch
          %590 = sbr.rel (%p588) target = $region56
        $region55: #{encode_fc_pallas.1} parent=51 // pred_region
          %p591 = scmp.lt.s32.totalorder %s23, 1
          %s592 = scalar_select %p591, %s23, 1
          %s593 = smul.addr %s592, 2
          %s594 = scalar_lea.vmem %s3, %s593
        $region56: #{encode_fc_pallas.1} parent=51 // pred_fallthru
          _
      $region52: #{encode_fc_pallas.1} parent=5 // pred_fallthru
        _
    $region6: #{encode_fc_pallas.1} parent=1 // loop_footer
      %s16 = sadd.s32 1, %s12
    $region7: #{encode_fc_pallas.1} parent=1 // loop_footer_branch
      %11 = sbr.rel target = $region3
    $region8: #{encode_fc_pallas.1} parent=1 // loop_exit
      _
    %595 = vsyncpa [#allocation4], 1
    %s596 = scalar_lea.sflag [#allocation4], 1
    %597 = vsyncpa %s596, 1

</llo_original>
